<compile_context>
chip_gen: v7x
topology: tpu7x:2x2x1
jax: 0.10.0
libtpu: 0.0.40
codegen_flags: <defaults>
</compile_context>

<pallas_src>
import jax
import jax.numpy as jnp
from jax import lax
from jax.experimental import pallas as pl
from jax.experimental.pallas import tpu as pltpu


def _nsp_kernel(x_ref, w_ref, b_ref, o_ref):
    # x_ref: [TB, H]   w_ref: [2, H]   b_ref: [1, 2]   o_ref: [TB, 2]
    x = x_ref[...].astype(jnp.float32)
    w = w_ref[...].astype(jnp.float32)
    b = b_ref[...].astype(jnp.float32)

    # Linear: logits = x @ W^T + b, contracting the H (lane) axis of both
    # operands directly so the lane-dense [2, H] weight is used as-is.
    logits = lax.dot_general(
        x, w,
        dimension_numbers=(((1,), (1,)), ((), ())),
        preferred_element_type=jnp.float32,
    ) + b                                                     # [TB, 2]

    # Numerically-stable log-softmax over the 2-class axis.  (Closed-form
    # softplus variant skipped: compute is fully hidden under the x DMA.)
    m = jnp.max(logits, axis=-1, keepdims=True)
    shifted = logits - m
    lse = jnp.log(jnp.sum(jnp.exp(shifted), axis=-1, keepdims=True))
    o_ref[...] = (shifted - lse).astype(o_ref.dtype)


def _round_up(x, m):
    return ((x + m - 1) // m) * m


def _physical_vmem_bytes():
    """Per-TensorCore physical VMEM; conservative 64 MiB (v7x) fallback."""
    try:
        info = pltpu.get_tpu_info()
        v = getattr(info, "vmem_capacity_bytes", None)
        if v:
            return int(v)
    except Exception:
        pass
    return 64 * 1024 * 1024


def _pick_batch_tile(batch, hidden, x_itemsize):
    """Batch tile: packed-sublane multiple of the input dtype, sized so the
    double-buffered x tiles + lane-padded output tiles fit the VMEM budget,
    and small enough that the grid has >= 2 steps (v7x megacore split)."""
    sub = {1: 32, 2: 16}.get(x_itemsize, 8)
    if batch <= sub:
        return batch                                   # full-dim block, always legal

    # Per-row pipeline footprint: x (2 buffers) + lane-padded f32 out (2 buffers).
    per_row = 2 * hidden * x_itemsize + 2 * 128 * 4
    budget = min(_physical_vmem_bytes() // 2, 40 * 1024 * 1024)
    cap = max((budget // per_row) // sub * sub, sub)

    # Prefer at least two grid steps so both v7x TensorCores get work.
    two_step = _round_up(pl.cdiv(batch, 2), sub)
    return min(two_step, cap, 4096)


def next_sentence_prediction(x, weight, bias):
    """
    x:      [B, S, H]  (float32 or bfloat16)
    weight: [2, H]     (PyTorch nn.Linear weight layout, passed as-is)
    bias:   [2]
    returns [B, 2] float32 log-probabilities
    """
    B, S, H = x.shape
    x_itemsize = jnp.dtype(x.dtype).itemsize
    w_itemsize = jnp.dtype(weight.dtype).itemsize

    # Fuse the CLS-token gather into the kernel DMA when the lane constraint
    # allows it (block last dim must be a multiple of 128 or the full dim):
    # view x as [B, S*H]; the first H columns of every row are exactly x[:, 0, :].
    if H % 128 == 0 and S > 1:
        x_in = x.reshape(B, S * H)                     # free view, no HBM copy
    elif S > 1:
        x_in = x[:, 0, :]                              # fallback: wrapper-side CLS slice
    else:
        x_in = x.reshape(B, H)

    b2d = bias.reshape(1, 2)

    tb = _pick_batch_tile(B, H, x_itemsize)
    grid = (pl.cdiv(B, tb),)

    # Explicit VMEM limit covering what we actually allocate (double-buffered
    # x and lane-padded out tiles, resident [2,H] weight + bias) plus headroom;
    # keeps large tiles compiling on v5e's 16 MiB scoped default and stays
    # under v7x's 64 MiB physical VMEM.
    phys = _physical_vmem_bytes()
    used = (2 * tb * H * x_itemsize                    # x tiles, double-buffered
            + 2 * _round_up(tb, 8) * 128 * 4           # out tiles, lane-padded, x2
            + 2 * 8 * H * w_itemsize                   # [2,H] weight, sublane-padded, x2
            + 2 * 8 * 128 * 4)                         # bias tile, x2
    vmem_limit = int(max(16 << 20, min(phys - (4 << 20), used + (8 << 20))))

    cost = pl.CostEstimate(
        flops=4 * B * H + 10 * B,
        transcendentals=3 * B,
        bytes_accessed=B * H * x_itemsize + 2 * H * w_itemsize + B * 2 * 4 + 8,
    )

    return pl.pallas_call(
        _nsp_kernel,
        out_shape=jax.ShapeDtypeStruct((B, 2), jnp.float32),
        grid_spec=pltpu.PrefetchScalarGridSpec(
            num_scalar_prefetch=0,
            grid=grid,
            in_specs=[
                pl.BlockSpec((tb, H), lambda i: (i, 0)),   # x: only the CLS columns are DMA'd
                pl.BlockSpec((2, H), lambda i: (0, 0)),    # weight: lane-dense, resident
                pl.BlockSpec((1, 2), lambda i: (0, 0)),    # bias: resident
            ],
            out_specs=pl.BlockSpec((tb, 2), lambda i: (i, 0)),
        ),
        compiler_params=pltpu.CompilerParams(
            dimension_semantics=("parallel",),             # batch tiles independent (v7x megacore)
            vmem_limit_bytes=vmem_limit,
        ),
        cost_estimate=cost,
    )(x_in, weight, b2d)


if __name__ == "__main__":
    key = jax.random.PRNGKey(0)
    k_x, k_w, k_b = jax.random.split(key, 3)

    # --- Main (fused CLS-gather) path: H multiple of 128, >=2 grid steps ------
    B, S, H = 16, 8, 128
    x = jax.random.normal(k_x, (B, S, H), dtype=jnp.float32)
    bound = 1.0 / (H ** 0.5)
    weight = jax.random.uniform(k_w, (2, H), minval=-bound, maxval=bound, dtype=jnp.float32)
    bias = jax.random.uniform(k_b, (2,), minval=-bound, maxval=bound, dtype=jnp.float32)

    out = jax.block_until_ready(next_sentence_prediction(x, weight, bias))
    ref = jax.nn.log_softmax(x[:, 0] @ weight.T + bias, axis=-1)
    assert out.shape == (B, 2)
    assert jnp.allclose(out, ref, atol=1e-5, rtol=1e-5), "fused-path mismatch vs reference"

    # --- bf16-input run (halves the dominant HBM read; f32 math in-kernel) ---
    xb = x.astype(jnp.bfloat16)
    outb = jax.block_until_ready(next_sentence_prediction(xb, weight, bias))
    refb = jax.nn.log_softmax(xb[:, 0].astype(jnp.float32) @ weight.T + bias, axis=-1)
    assert jnp.allclose(outb, refb, atol=5e-3, rtol=5e-3), "bf16-path mismatch vs reference"

    # --- Partial last batch tile (B % tb != 0) exercises output masking ------
    B3, S3, H3 = 20, 4, 128
    x3 = jax.random.normal(k_x, (B3, S3, H3), dtype=jnp.float32)
    w3 = jax.random.uniform(k_w, (2, H3), minval=-bound, maxval=bound, dtype=jnp.float32)
    b3 = jax.random.uniform(k_b, (2,), minval=-bound, maxval=bound, dtype=jnp.float32)
    out3 = jax.block_until_ready(next_sentence_prediction(x3, w3, b3))
    ref3 = jax.nn.log_softmax(x3[:, 0] @ w3.T + b3, axis=-1)
    assert jnp.allclose(out3, ref3, atol=1e-5, rtol=1e-5), "partial-tile mismatch vs reference"

    # --- Fallback path (H not a multiple of 128 -> wrapper-side CLS slice) ---
    B2, S2, H2 = 2, 8, 32
    x2 = jax.random.normal(k_x, (B2, S2, H2), dtype=jnp.float32)
    bound2 = 1.0 / (H2 ** 0.5)
    w2 = jax.random.uniform(k_w, (2, H2), minval=-bound2, maxval=bound2, dtype=jnp.float32)
    b2 = jax.random.uniform(k_b, (2,), minval=-bound2, maxval=bound2, dtype=jnp.float32)
    out2 = jax.block_until_ready(next_sentence_prediction(x2, w2, b2))
    ref2 = jax.nn.log_softmax(x2[:, 0] @ w2.T + b2, axis=-1)
    assert jnp.allclose(out2, ref2, atol=1e-5, rtol=1e-5), "fallback-path mismatch vs reference"

    print("KERNEL_OK")
</pallas_src>

<mosaic_0001>
module attributes {stable_mosaic.version = 11 : i64} {
  func.func @_nsp_kernel(%arg0: i32, %arg1: memref<8x128xf32, #tpu.memory_space<vmem>>, %arg2: memref<2x128xf32, #tpu.memory_space<vmem>>, %arg3: memref<1x2xf32, #tpu.memory_space<vmem>>, %arg4: memref<8x2xf32, #tpu.memory_space<vmem>>) attributes {dimension_semantics = [#tpu.dimension_semantics<parallel>], iteration_bounds = array<i64: 2>, scalar_prefetch = 0 : i64, scratch_operands = 0 : i64, tpu.core_type = #tpu.core_type<tc>, window_params = [{transform_indices = @transform_0, window_bounds = array<i64: 8, 128>}, {pipeline_mode = #tpu.pipeline_mode<synchronous>, transform_indices = @transform_1, window_bounds = array<i64: 2, 128>}, {pipeline_mode = #tpu.pipeline_mode<synchronous>, transform_indices = @transform_2, window_bounds = array<i64: 1, 2>}, {transform_indices = @transform_3, window_bounds = array<i64: 8, 2>}]} {
    %c0 = arith.constant 0 : index
    %c0_0 = arith.constant 0 : index
    %0 = vector.load %arg1[%c0, %c0_0] : memref<8x128xf32, #tpu.memory_space<vmem>>, vector<8x128xf32>
    %c0_1 = arith.constant 0 : index
    %c0_2 = arith.constant 0 : index
    %1 = vector.load %arg2[%c0_1, %c0_2] : memref<2x128xf32, #tpu.memory_space<vmem>>, vector<2x128xf32>
    %c0_3 = arith.constant 0 : index
    %c0_4 = arith.constant 0 : index
    %2 = vector.load %arg3[%c0_3, %c0_4] : memref<1x2xf32, #tpu.memory_space<vmem>>, vector<1x2xf32>
    %cst = arith.constant dense<0.000000e+00> : vector<8x2xf32>
    %3 = tpu.matmul %0, %1, %cst {dimension_numbers = #tpu.dot_dimension_numbers<[1], [1], [0], [0], [0, 0, 1, 0], [], []>} : vector<8x128xf32>, vector<2x128xf32>, vector<8x2xf32> -> vector<8x2xf32>
    %4 = vector.broadcast %2 : vector<1x2xf32> to vector<8x2xf32>
    %5 = arith.addf %3, %4 : vector<8x2xf32>
    %cst_5 = arith.constant dense<0xFF800000> : vector<8xf32>
    %6 = vector.multi_reduction <maximumf>, %5, %cst_5 [1] : vector<8x2xf32> to vector<8xf32>
    %7 = vector.shape_cast %6 : vector<8xf32> to vector<8x1xf32>
    %8 = vector.broadcast %7 : vector<8x1xf32> to vector<8x2xf32>
    %9 = arith.subf %5, %8 : vector<8x2xf32>
    %10 = math.exp %9 : vector<8x2xf32>
    %cst_6 = arith.constant dense<0.000000e+00> : vector<8xf32>
    %11 = vector.multi_reduction <add>, %10, %cst_6 [1] : vector<8x2xf32> to vector<8xf32>
    %12 = vector.shape_cast %11 : vector<8xf32> to vector<8x1xf32>
    %13 = math.log %12 : vector<8x1xf32>
    %14 = vector.broadcast %13 : vector<8x1xf32> to vector<8x2xf32>
    %15 = arith.subf %9, %14 : vector<8x2xf32>
    %c0_7 = arith.constant 0 : index
    %c0_8 = arith.constant 0 : index
    %16 = vector.load %arg4[%c0_7, %c0_8] : memref<8x2xf32, #tpu.memory_space<vmem>>, vector<8x2xf32>
    tpu.vector_store %arg4[%c0_7, %c0_8], %15 {strides = array<i32>} : memref<8x2xf32, #tpu.memory_space<vmem>>, vector<8x2xf32>,
    return
  }
  func.func @transform_0(%arg0: i32) -> (i32, i32) {
    %c0_i32 = arith.constant 0 : i32
    %c0_i32_0 = arith.constant 0 : i32
    return %arg0, %c0_i32 : i32, i32
  }
  func.func @transform_1(%arg0: i32) -> (i32, i32) {
    %c0_i32 = arith.constant 0 : i32
    %c0_i32_0 = arith.constant 0 : i32
    %c0_i32_1 = arith.constant 0 : i32
    return %c0_i32, %c0_i32_0 : i32, i32
  }
  func.func @transform_2(%arg0: i32) -> (i32, i32) {
    %c0_i32 = arith.constant 0 : i32
    %c0_i32_0 = arith.constant 0 : i32
    %c0_i32_1 = arith.constant 0 : i32
    return %c0_i32, %c0_i32_0 : i32, i32
  }
  func.func @transform_3(%arg0: i32) -> (i32, i32) {
    %c0_i32 = arith.constant 0 : i32
    %c0_i32_0 = arith.constant 0 : i32
    return %arg0, %c0_i32 : i32, i32
  }
}

</mosaic_0001>

<llo_original>
// kernel: tpu_custom_call.1
$region0: #{tpu_custom_call.1}
  #allocation0 [shape = 'u32[]', space=smem, size = 0x4, offset = 0x4, fixed_abs, tag = 'smem constant byte address 0x4 - core index']
  #allocation1 [shape = 'u32[144,128]{1,0:T(1,128)}', space=vmem, size = 0x12000, scoped, tag = 'internal scratch']
  %s0 = inlined_call_operand.hbm [shape: f32[16,1024], index: 0, kind: input, shape index: {}]
  %s1 = inlined_call_operand.vmem [shape: f32[2,128], index: 1, kind: input, shape index: {}]
  %s2 = inlined_call_operand.vmem [shape: f32[1,2], index: 2, kind: input, shape index: {}]
  %s3 = inlined_call_operand.vmem [shape: f32[16,2], index: 3, kind: output, shape index: {}]
  %s4 = sld [smem:[#allocation0]]
  $region49: #{tpu_custom_call.1} parent=0
    _
  %s6 = ssub.s32 1, %s4
  %s7 = scalar_select 0, %s6, %s4
  $region1: #{tpu_custom_call.1} parent=0
    #allocation2 [shape = 'u8[8192]{0}', space=vmem, size = 0x2000, scoped, tag = 'input window, operand 0']
    #allocation3 [shape = 's32[2]{0}', space=sflag, size = 0x8, scoped, tag = 'scoped memory for tpu_custom_call.1']
    %8 = vsyncpa [#allocation3], 0
    %s9 = scalar_lea.sflag [#allocation3], 1
    %10 = vsyncpa %s9, 0
    loop: start=0, step=1, limit=4
    $region2: #{tpu_custom_call.1} parent=1 // loop_pre_header
      _
    $region3: #{tpu_custom_call.1} parent=1 // loop_header
      %s12 = sphi 0, %s16
      %p13 = scmp.ge.s32.totalorder %s12, 4
      %s22 = sphi 0, %s24
      %s25 = sphi 0, %s22
      %s26 = sphi 0, %s25
      %s42 = sphi 0, %s26
      %s46 = sphi 0, %s46
      %s48 = sphi 0, %s46
      %s49 = sphi 0, %s48
      %s63 = sphi 0, %s49
      %s67 = sphi 0, %s67
      %s69 = sphi 0, %s67
      %s70 = sphi 0, %s69
      %s84 = sphi 0, %s70
      %s90 = sphi 0, %s92
      %s93 = sphi 0, %s90
      %s94 = sphi 0, %s93
      %s110 = sphi 0, %s94
    $region4: #{tpu_custom_call.1} parent=1 // loop_header_branch
      %15 = sbr.rel (%p13) target = $region8
    $region5: #{tpu_custom_call.1} parent=1 // loop_body
      %s17 = ssub.s32 %s12, 1
      %s18 = ssub.s32 %s12, 2
      %s19 = sadd.s32 %s12, 1
      %s20 = ssub.s32 %s12, %s19
      %p21 = scmp.eq.s32.totalorder %s20, 0
      %s23 = sadd.s32 %s22, 1
      %s24 = scalar_select %p21, %s22, %s23
      %p27 = pneg %p21
      %p28 = scmp.eq.s32.totalorder %s12, 1
      %p29 = por %p27, %p28
      %p30 = scmp.ne.s32.totalorder %s22, %s25
      %p31 = scmp.eq.s32.totalorder %s12, 0
      %p32 = por %p30, %p31
      %p33 = scmp.ne.s32.totalorder %s22, %s25
      %p34 = scmp.eq.s32.totalorder %s17, 1
      %p35 = por %p33, %p34
      %p36 = scmp.ne.s32.totalorder %s25, %s26
      %p37 = scmp.eq.s32.totalorder %s17, 0
      %p38 = por %p36, %p37
      %p39 = scmp.ne.s32.totalorder %s25, %s26
      %p40 = scmp.eq.s32.totalorder %s18, 1
      %p41 = por %p39, %p40
      %p43 = scmp.ne.s32.totalorder %s26, %s42
      %p44 = scmp.eq.s32.totalorder %s18, 0
      %p45 = por %p43, %p44
      %s47 = sadd.s32 %s46, 1
      %p50 = scmp.eq.s32.totalorder %s12, 1
      %p51 = scmp.ne.s32.totalorder %s46, %s48
      %p52 = scmp.eq.s32.totalorder %s12, 0
      %p53 = por %p51, %p52
      %p54 = scmp.ne.s32.totalorder %s46, %s48
      %p55 = scmp.eq.s32.totalorder %s17, 1
      %p56 = por %p54, %p55
      %p57 = scmp.ne.s32.totalorder %s48, %s49
      %p58 = scmp.eq.s32.totalorder %s17, 0
      %p59 = por %p57, %p58
      %p60 = scmp.ne.s32.totalorder %s48, %s49
      %p61 = scmp.eq.s32.totalorder %s18, 1
      %p62 = por %p60, %p61
      %p64 = scmp.ne.s32.totalorder %s49, %s63
      %p65 = scmp.eq.s32.totalorder %s18, 0
      %p66 = por %p64, %p65
      %s68 = sadd.s32 %s67, 1
      %p71 = scmp.eq.s32.totalorder %s12, 1
      %p72 = scmp.ne.s32.totalorder %s67, %s69
      %p73 = scmp.eq.s32.totalorder %s12, 0
      %p74 = por %p72, %p73
      %p75 = scmp.ne.s32.totalorder %s67, %s69
      %p76 = scmp.eq.s32.totalorder %s17, 1
      %p77 = por %p75, %p76
      %p78 = scmp.ne.s32.totalorder %s69, %s70
      %p79 = scmp.eq.s32.totalorder %s17, 0
      %p80 = por %p78, %p79
      %p81 = scmp.ne.s32.totalorder %s69, %s70
      %p82 = scmp.eq.s32.totalorder %s18, 1
      %p83 = por %p81, %p82
      %p85 = scmp.ne.s32.totalorder %s70, %s84
      %p86 = scmp.eq.s32.totalorder %s18, 0
      %p87 = por %p85, %p86
      %s88 = ssub.s32 %s12, %s19
      %p89 = scmp.eq.s32.totalorder %s88, 0
      %s91 = sadd.s32 %s90, 1
      %s92 = scalar_select %p89, %s90, %s91
      %p95 = pneg %p89
      %p96 = scmp.eq.s32.totalorder %s12, 1
      %p97 = por %p95, %p96
      %p98 = scmp.ne.s32.totalorder %s90, %s93
      %p99 = scmp.eq.s32.totalorder %s12, 0
      %p100 = por %p98, %p99
      %p101 = scmp.ne.s32.totalorder %s90, %s93
      %p102 = scmp.eq.s32.totalorder %s17, 1
      %p103 = por %p101, %p102
      %p104 = scmp.ne.s32.totalorder %s93, %s94
      %p105 = scmp.eq.s32.totalorder %s17, 0
      %p106 = por %p104, %p105
      %p107 = scmp.ne.s32.totalorder %s93, %s94
      %p108 = scmp.eq.s32.totalorder %s18, 1
      %p109 = por %p107, %p108
      %p111 = scmp.ne.s32.totalorder %s94, %s110
      %p112 = scmp.eq.s32.totalorder %s18, 0
      %p113 = por %p111, %p112
      %p114 = scmp.le.s32.totalorder 1, %s12
      %p115 = scmp.lt.s32.totalorder %s12, 3
      %p116 = pnand %p114, %p115
      %p117 = pneg %p116
      // Predicated region
      $region9: #{tpu_custom_call.1} parent=5 // pred_check
        _
      $region10: #{tpu_custom_call.1} parent=5 // pred_check_branch
        %119 = sbr.rel (%p116) target = $region12
      $region11: #{tpu_custom_call.1} parent=5 // pred_region
        %s120 = ssub.s32 %s12, 1
        // Predicated region
        $region13: #{tpu_custom_call.1} parent=11 // pred_check
          %p121 = pneg %p59
        $region14: #{tpu_custom_call.1} parent=11 // pred_check_branch
          %123 = sbr.rel (%p121) target = $region16
        $region15: #{tpu_custom_call.1} parent=11 // pred_region
          _
        $region16: #{tpu_custom_call.1} parent=11 // pred_fallthru
          _
        // Predicated region
        $region17: #{tpu_custom_call.1} parent=11 // pred_check
          %p124 = pneg %p80
        $region18: #{tpu_custom_call.1} parent=11 // pred_check_branch
          %126 = sbr.rel (%p124) target = $region20
        $region19: #{tpu_custom_call.1} parent=11 // pred_region
          _
        $region20: #{tpu_custom_call.1} parent=11 // pred_fallthru
          _
      $region12: #{tpu_custom_call.1} parent=5 // pred_fallthru
        _
      %p127 = scmp.lt.s32.totalorder %s12, 2
      // Predicated region
      $region21: #{tpu_custom_call.1} parent=5 // pred_check
        %p128 = pneg %p127
      $region22: #{tpu_custom_call.1} parent=5 // pred_check_branch
        %130 = sbr.rel (%p128) target = $region24
      $region23: #{tpu_custom_call.1} parent=5 // pred_region
        // Predicated region
        $region25: #{tpu_custom_call.1} parent=23 // pred_check
          %p131 = pneg %p32
        $region26: #{tpu_custom_call.1} parent=23 // pred_check_branch
          %133 = sbr.rel (%p131) target = $region28
        $region27: #{tpu_custom_call.1} parent=23 // pred_region
          %s134 = sand.u32 %s22, 1
          %s135 = scalar_lea.sflag [#allocation3], %s134
          %s136 = sand.u32 %s22, 1
          %s137 = smul.addr %s136, 8
          %s138 = scalar_lea.vmem [#allocation2], %s137
          %s140 = ssub.s32 128, 128
          %141 = vsyncadd %s135, %s140
          %s142 = smul.addr %s12, 8
          %s143 = smul.addr %s142, 128
          %s144 = scalar_lea.hbm %s0, %s143
          %s146 = sshll.u32 %s138, 4
          %s147 = int_to_ptr.vmem [resolvable:$true] %s146
          %149 = dma.hbm_to_vmem [thread:$0]  %s144, 128, %s147, %s135
        $region28: #{tpu_custom_call.1} parent=23 // pred_fallthru
          _
      $region24: #{tpu_custom_call.1} parent=5 // pred_fallthru
        _
      %p150 = scmp.le.s32.totalorder 1, %s12
      %p151 = scmp.lt.s32.totalorder %s12, 3
      %p152 = pnand %p150, %p151
      %p153 = pneg %p152
      // Predicated region
      $region29: #{tpu_custom_call.1} parent=5 // pred_check
        _
      $region30: #{tpu_custom_call.1} parent=5 // pred_check_branch
        %155 = sbr.rel (%p152) target = $region32
      $region31: #{tpu_custom_call.1} parent=5 // pred_region
        %s156 = ssub.s32 %s12, 1
        %s157 = sand.u32 %s25, 1
        %s158 = scalar_lea.sflag [#allocation3], %s157
        %s159 = sand.u32 %s25, 1
        %s160 = smul.addr %s159, 8
        %s161 = scalar_lea.vmem [#allocation2], %s160
        // Predicated region
        $region33: #{tpu_custom_call.1} parent=31 // pred_check
          %p162 = pneg %p38
        $region34: #{tpu_custom_call.1} parent=31 // pred_check_branch
          %164 = sbr.rel (%p162) target = $region36
        $region35: #{tpu_custom_call.1} parent=31 // pred_region
          %165 = dma.done %s158, 128
        $region36: #{tpu_custom_call.1} parent=31 // pred_fallthru
          _
        %s166 = sand.u32 %s25, 1
        %s167 = scalar_lea.sflag [#allocation3], %s166
        %s168 = sand.u32 %s25, 1
        %s169 = smul.addr %s168, 8
        %s170 = scalar_lea.vmem [#allocation2], %s169
        %p171 = pneg %p38
        %p172 = pneg %p35
        %p173 = pneg %p59
        %p174 = pneg %p56
        %p175 = pneg %p80
        %p176 = pneg %p77
        %p177 = pneg %p106
        %p178 = pneg %p103
        %p179 = scmp.lt.s32.totalorder %s17, 1
        %s180 = scalar_select %p179, %s17, 1
        %s181 = smul.addr %s180, 8
        %s182 = scalar_lea.vmem %s3, %s181
        %p183 = scmp.lt.s32.totalorder %s17, 1
        %s184 = scalar_select %p183, %s17, 1
        %s185 = smul.addr %s184, 8
        %s186 = scalar_lea.vmem %s3, %s185
        %v187 = vld [vmem:[%s161] sm:$0xff]
        %v188 = vld [vmem:[%s1] sm:$0x3]
        %v189 = vld [vmem:[%s2] sm:$0x1]
        %v191 = vlaneseq
        %v192 = vshrl.u32 %v191, 7
        %v193 = vsub.s32 0, %v192
        %v194 = vrot.slane %v189, %v193
        %196 = vmatprep.subr.mxu0 0.0
        %197 = vmatpush1.xpose.msra.mxu0 %v188
        %198 = vmatprep.subr.mxu0 0.0
        %199 = vmatpush1.xpose.msra.mxu0 0.0
        %200 = vmatprep.subr.mxu0 0.0
        %201 = vmatpush1.xpose.msra.mxu0 0.0
        %202 = vmatprep.subr.mxu0 0.0
        %203 = vmatpush1.xpose.msra.mxu0 0.0
        %204 = vmatprep.subr.mxu0 0.0
        %205 = vmatpush1.xpose.msra.mxu0 0.0
        %206 = vmatprep.subr.mxu0 0.0
        %207 = vmatpush1.xpose.msra.mxu0 0.0
        %208 = vmatprep.subr.mxu0 0.0
        %209 = vmatpush1.xpose.msra.mxu0 0.0
        %210 = vmatprep.subr.mxu0 0.0
        %211 = vmatpush1.xpose.msra.mxu0 0.0
        %212 = vmatprep.subr.mxu0 0.0
        %213 = vmatpush1.xpose.msra.mxu0 0.0
        %214 = vmatprep.subr.mxu0 0.0
        %215 = vmatpush1.xpose.msra.mxu0 0.0
        %216 = vmatprep.subr.mxu0 0.0
        %217 = vmatpush1.xpose.msra.mxu0 0.0
        %218 = vmatprep.subr.mxu0 0.0
        %219 = vmatpush1.xpose.msra.mxu0 0.0
        %220 = vmatprep.subr.mxu0 0.0
        %221 = vmatpush1.xpose.msra.mxu0 0.0
        %222 = vmatprep.subr.mxu0 0.0
        %223 = vmatpush1.xpose.msra.mxu0 0.0
        %224 = vmatprep.subr.mxu0 0.0
        %225 = vmatpush1.xpose.msra.mxu0 0.0
        %226 = vmatprep.subr.mxu0 0.0
        %227 = vmatpush1.xpose.msra.mxu0 0.0
        %228 = vmatprep.subr.mxu0 0.0
        %229 = vmatpush1.xpose.msra.mxu0 0.0
        %230 = vmatprep.subr.mxu0 0.0
        %231 = vmatpush1.xpose.msra.mxu0 0.0
        %232 = vmatprep.subr.mxu0 0.0
        %233 = vmatpush1.xpose.msra.mxu0 0.0
        %234 = vmatprep.subr.mxu0 0.0
        %235 = vmatpush1.xpose.msra.mxu0 0.0
        %236 = vmatprep.subr.mxu0 0.0
        %237 = vmatpush1.xpose.msra.mxu0 0.0
        %238 = vmatprep.subr.mxu0 0.0
        %239 = vmatpush1.xpose.msra.mxu0 0.0
        %240 = vmatprep.subr.mxu0 0.0
        %241 = vmatpush1.xpose.msra.mxu0 0.0
        %242 = vmatprep.subr.mxu0 0.0
        %243 = vmatpush1.xpose.msra.mxu0 0.0
        %244 = vmatprep.subr.mxu0 0.0
        %245 = vmatpush1.xpose.msra.mxu0 0.0
        %246 = vmatprep.subr.mxu0 0.0
        %247 = vmatpush1.xpose.msra.mxu0 0.0
        %248 = vmatprep.subr.mxu0 0.0
        %249 = vmatpush1.xpose.msra.mxu0 0.0
        %250 = vmatprep.subr.mxu0 0.0
        %251 = vmatpush1.xpose.msra.mxu0 0.0
        %252 = vmatprep.subr.mxu0 0.0
        %253 = vmatpush1.xpose.msra.mxu0 0.0
        %254 = vmatprep.subr.mxu0 0.0
        %255 = vmatpush1.xpose.msra.mxu0 0.0
        %256 = vmatprep.subr.mxu0 0.0
        %257 = vmatpush1.xpose.msra.mxu0 0.0
        %258 = vmatprep.subr.mxu0 0.0
        %259 = vmatpush1.xpose.msra.mxu0 0.0
        %260 = vmatprep.mubr.f32.mxu0 0.0
        %261 = vmatmul.mubr.f32.gmra.mrb[0].mxu0 %v187
        %v262 = vpop.f32.mrb[0].mxu0
        %v263 = vadd.f32 %v194, %v262
        %v264 = vpop.f32.mrb[0].mxu0
        %265 = vdwg.mxu0
        %vm266 = vcmask 15360
        %v267 = vsel %vm266, %v263, -inf
        %268 = vmax.xlane.f32.xlu0 %v267
        %v269 = vpop.xlane.xlu0 %268
        %v270 = vsub.f32 %v263, %v269
        %v271 = vmul.f32 %v270, 1.442695
        %v272 = vpow.pop %v271
        %v273 = vsel %vm266, %v272, 0.0
        %274 = vadd.xlane.f32.xlu0 %v273
        %v275 = vpop.xlane.xlu0 %274
        %v276 = vlog2.pop %v275
        %v277 = vmul.f32 %v276, 0.6931472
        %v278 = vsub.f32 %v270, %v277
        %279 = vst.msk [vmem:[%s186] sm:$0xff] %vm266, %v278
        %p280 = scmp.lt.s32.totalorder %s17, 1
        %s281 = scalar_select %p280, %s17, 1
        %s282 = smul.addr %s281, 8
        %s283 = scalar_lea.vmem %s3, %s282
        // Predicated region
        $region37: #{tpu_custom_call.1} parent=31 // pred_check
          %p284 = pneg %p103
        $region38: #{tpu_custom_call.1} parent=31 // pred_check_branch
          %286 = sbr.rel (%p284) target = $region40
        $region39: #{tpu_custom_call.1} parent=31 // pred_region
          _
        $region40: #{tpu_custom_call.1} parent=31 // pred_fallthru
          _
      $region32: #{tpu_custom_call.1} parent=5 // pred_fallthru
        _
      %p287 = scmp.le.s32.totalorder 2, %s12
      // Predicated region
      $region41: #{tpu_custom_call.1} parent=5 // pred_check
        %p288 = pneg %p287
      $region42: #{tpu_custom_call.1} parent=5 // pred_check_branch
        %290 = sbr.rel (%p288) target = $region44
      $region43: #{tpu_custom_call.1} parent=5 // pred_region
        %s291 = ssub.s32 %s12, 2
        // Predicated region
        $region45: #{tpu_custom_call.1} parent=43 // pred_check
          %p292 = pneg %p109
        $region46: #{tpu_custom_call.1} parent=43 // pred_check_branch
          %294 = sbr.rel (%p292) target = $region48
        $region47: #{tpu_custom_call.1} parent=43 // pred_region
          %p295 = scmp.lt.s32.totalorder %s18, 1
          %s296 = scalar_select %p295, %s18, 1
          %s297 = smul.addr %s296, 8
          %s298 = scalar_lea.vmem %s3, %s297
        $region48: #{tpu_custom_call.1} parent=43 // pred_fallthru
          _
      $region44: #{tpu_custom_call.1} parent=5 // pred_fallthru
        _
    $region6: #{tpu_custom_call.1} parent=1 // loop_footer
      %s16 = sadd.s32 1, %s12
    $region7: #{tpu_custom_call.1} parent=1 // loop_footer_branch
      %11 = sbr.rel target = $region3
    $region8: #{tpu_custom_call.1} parent=1 // loop_exit
      _
    %299 = vsyncpa [#allocation3], 1
    %s300 = scalar_lea.sflag [#allocation3], 1
    %301 = vsyncpa %s300, 1

</llo_original>
